<compile_context>
chip_gen: v6e
topology: v6e:2x2x1
jax: 0.10.0
libtpu: 0.0.40
codegen_flags: <defaults>
</compile_context>

<pallas_src>
import functools

import jax
import jax.numpy as jnp
from jax.experimental import pallas as pl
from jax.experimental.pallas import tpu as pltpu


def _baseline_kernel(xt_ref, w_ref, b_ref, o_ref):
    # xt_ref: (K, TB) f32   K = S*E, batch along lanes
    # w_ref : (1, K)  f32   fc weight tiled over the S positions, pre-scaled by 1/S
    # b_ref : (1,)    f32   fc bias, in SMEM
    # o_ref : (1, TB) f32   lane-dense logits for this batch block
    logits = jnp.dot(w_ref[...], xt_ref[...],
                     preferred_element_type=jnp.float32)        # (1, TB) on the MXU
    o_ref[...] = jax.nn.sigmoid(logits + b_ref[0])


@functools.partial(jax.jit, static_argnames=("block_b",))
def baseline_forward(x_tokens, lengths, emb_table, w_fc, b_fc,
                     max_sentence_length=None, *, block_b=128):
    # lengths / max_sentence_length are unused in the reference forward as well.
    del lengths, max_sentence_length
    B, S = x_tokens.shape
    E = emb_table.shape[1]
    K = S * E
    TB = block_b
    B_pad = ((B + TB - 1) // TB) * TB
    nb = B_pad // TB

    # nn.Embedding gather (glue, no clean Pallas equivalent for arbitrary gather).
    embx = emb_table[x_tokens].astype(jnp.float32)               # (B, S, E)

    # Layout plumbing: flatten (S, E) and put batch on the lane axis.  Padded
    # batch columns are zeros; their logits are sliced away below.
    x2 = embx.reshape(B, K)
    x2 = jnp.pad(x2, ((0, B_pad - B), (0, 0)))
    xt = x2.T                                                    # (K, B_pad)

    # Fold the mean's 1/S into the fc weight: w_row[s*E + e] = w_fc[0, e] / S.
    w_row = (jnp.tile(w_fc.reshape(1, E), (1, S)) / S).astype(jnp.float32)  # (1, K)
    b = b_fc.reshape(1).astype(jnp.float32)                      # (1,) -> SMEM

    out = pl.pallas_call(
        _baseline_kernel,
        out_shape=jax.ShapeDtypeStruct((1, B_pad), jnp.float32),
        grid_spec=pltpu.PrefetchScalarGridSpec(
            num_scalar_prefetch=0,
            grid=(nb,),
            in_specs=[
                pl.BlockSpec((K, TB), lambda bb: (0, bb)),       # batch block on lanes
                pl.BlockSpec((1, K), lambda bb: (0, 0)),         # shared weight row
                pl.BlockSpec(memory_space=pltpu.MemorySpace.SMEM),  # fc bias scalar
            ],
            out_specs=pl.BlockSpec((1, TB), lambda bb: (0, bb)), # lane-dense logits
        ),
        compiler_params=pltpu.CompilerParams(
            dimension_semantics=("parallel",)),                  # megacore on v7x
    )(xt, w_row, b)

    return out[0, :B].reshape(B, 1)


def baseline_reference(x_tokens, emb_table, w_fc, b_fc):
    # Pure-JAX reference mirroring the torch module.
    embx = emb_table[x_tokens].astype(jnp.float32)               # (B, S, E)
    pooled = jnp.mean(embx, axis=1)                              # (B, E)
    logits = pooled @ w_fc.T + b_fc                              # (B, 1)
    return jax.nn.sigmoid(logits)


if __name__ == "__main__":
    batch = 2
    seq = 8
    embedding_dim = 32
    vocab_size = 100

    key = jax.random.PRNGKey(0)
    k_emb, k_w, k_b, k_x = jax.random.split(key, 4)

    emb_table = jax.random.normal(k_emb, (vocab_size, embedding_dim), jnp.float32)
    w_fc = 0.1 * jax.random.normal(k_w, (1, embedding_dim), jnp.float32)  # Linear(E, 1) weight
    b_fc = 0.1 * jax.random.normal(k_b, (1,), jnp.float32)                # Linear bias
    x_tokens = jax.random.randint(k_x, (batch, seq), 0, vocab_size, jnp.int32)
    lengths = jnp.full((batch,), seq, jnp.int32)   # unused, matches torch signature

    out = baseline_forward(x_tokens, lengths, emb_table, w_fc, b_fc)
    out = jax.block_until_ready(out)

    ref = baseline_reference(x_tokens, emb_table, w_fc, b_fc)
    assert out.shape == (batch, 1)
    assert jnp.allclose(out, ref, rtol=1e-5, atol=1e-5), (out, ref)

    print("KERNEL_OK")
</pallas_src>

<mosaic_0001>
module attributes {stable_mosaic.version = 11 : i64} {
  func.func @_baseline_kernel(%arg0: i32, %arg1: memref<256x128xf32, #tpu.memory_space<vmem>>, %arg2: memref<1x256xf32, #tpu.memory_space<vmem>>, %arg3: memref<1xf32, #tpu.memory_space<smem>>, %arg4: memref<1x128xf32, #tpu.memory_space<vmem>>) attributes {dimension_semantics = [#tpu.dimension_semantics<parallel>], iteration_bounds = array<i64: 1>, scalar_prefetch = 0 : i64, scratch_operands = 0 : i64, tpu.core_type = #tpu.core_type<tc>, window_params = [{transform_indices = @transform_0, window_bounds = array<i64: 256, 128>}, {pipeline_mode = #tpu.pipeline_mode<synchronous>, transform_indices = @transform_1, window_bounds = array<i64: 1, 256>}, {transform_indices = @transform_2, window_bounds = array<i64: 1>}, {transform_indices = @transform_3, window_bounds = array<i64: 1, 128>}]} {
    %c0 = arith.constant 0 : index
    %c0_0 = arith.constant 0 : index
    %0 = vector.load %arg2[%c0, %c0_0] : memref<1x256xf32, #tpu.memory_space<vmem>>, vector<1x256xf32>
    %c0_1 = arith.constant 0 : index
    %c0_2 = arith.constant 0 : index
    %1 = vector.load %arg1[%c0_1, %c0_2] : memref<256x128xf32, #tpu.memory_space<vmem>>, vector<256x128xf32>
    %cst = arith.constant dense<0.000000e+00> : vector<1x128xf32>
    %2 = tpu.matmul %0, %1, %cst {dimension_numbers = #tpu.dot_dimension_numbers<[1], [0], [0], [1], [0, 0, 1, 1], [], []>} : vector<1x256xf32>, vector<256x128xf32>, vector<1x128xf32> -> vector<1x128xf32>
    %c0_3 = arith.constant 0 : index
    %3 = memref.load %arg3[%c0_3] : memref<1xf32, #tpu.memory_space<smem>>
    %4 = vector.broadcast %3 : f32 to vector<1x128xf32>
    %5 = arith.addf %2, %4 : vector<1x128xf32>
    %6 = arith.negf %5 : vector<1x128xf32>
    %7 = math.exp %6 : vector<1x128xf32>
    %cst_4 = arith.constant 1.000000e+00 : f32
    %8 = vector.broadcast %cst_4 : f32 to vector<1x128xf32>
    %9 = arith.addf %8, %7 : vector<1x128xf32>
    %10 = arith.divf %8, %9 : vector<1x128xf32>
    %c0_5 = arith.constant 0 : index
    %c0_6 = arith.constant 0 : index
    %11 = vector.load %arg4[%c0_5, %c0_6] : memref<1x128xf32, #tpu.memory_space<vmem>>, vector<1x128xf32>
    tpu.vector_store %arg4[%c0_5, %c0_6], %10 {strides = array<i32>} : memref<1x128xf32, #tpu.memory_space<vmem>>, vector<1x128xf32>,
    return
  }
  func.func @transform_0(%arg0: i32) -> (i32, i32) {
    %c0_i32 = arith.constant 0 : i32
    %c0_i32_0 = arith.constant 0 : i32
    return %c0_i32, %arg0 : i32, i32
  }
  func.func @transform_1(%arg0: i32) -> (i32, i32) {
    %c0_i32 = arith.constant 0 : i32
    %c0_i32_0 = arith.constant 0 : i32
    %c0_i32_1 = arith.constant 0 : i32
    return %c0_i32, %c0_i32_0 : i32, i32
  }
  func.func @transform_2(%arg0: i32) -> i32 {
    %c0_i32 = arith.constant 0 : i32
    %c0_i32_0 = arith.constant 0 : i32
    return %c0_i32 : i32
  }
  func.func @transform_3(%arg0: i32) -> (i32, i32) {
    %c0_i32 = arith.constant 0 : i32
    %c0_i32_0 = arith.constant 0 : i32
    return %c0_i32, %arg0 : i32, i32
  }
}

</mosaic_0001>

<llo_original>
// kernel: baseline_forward.1
$region0: #{baseline_forward.1}
  #allocation0 [shape = 'u32[]', space=smem, size = 0x4, offset = 0x4, fixed_abs, tag = 'smem constant byte address 0x4 - core index']
  #allocation1 [shape = 'u32[144,128]{1,0:T(1,128)}', space=vmem, size = 0x12000, scoped, tag = 'internal scratch']
  #allocation2 [shape = 'f32[1]{0:T(128)S(6)}', space=smem, size = 0x200, scoped, tag = 'scoped memory for baseline_forward.1']
  %s0 = inlined_call_operand.vmem [shape: f32[256,128], index: 0, kind: input, shape index: {}]
  %s1 = inlined_call_operand.vmem [shape: f32[1,256], index: 1, kind: input, shape index: {}]
  %s2 = inlined_call_operand.<no memory space> [shape: f32[1], index: 2, kind: input, shape index: {}]
  %s3 = inlined_call_operand.vmem [shape: f32[1,128], index: 3, kind: output, shape index: {}]
  %s4 = sld [smem:[#allocation0]]
  $region22: #{baseline_forward.1} parent=0
    _
  %s6 = ssub.s32 1, %s4
  %s7 = scalar_select 0, %s6, %s4
  %8 = sst [smem:[#allocation2]] %s2
  // Predicated region
  $region2: #{baseline_forward.1} parent=0 // pred_check
    _
  $region3: #{baseline_forward.1} parent=0 // pred_check_branch
    %10 = sbr.rel (0) target = $region5
  $region4: #{baseline_forward.1} parent=0 // pred_region
    _
  $region5: #{baseline_forward.1} parent=0 // pred_fallthru
    _
  // Predicated region
  $region6: #{baseline_forward.1} parent=0 // pred_check
    _
  $region7: #{baseline_forward.1} parent=0 // pred_check_branch
    %12 = sbr.rel (0) target = $region9
  $region8: #{baseline_forward.1} parent=0 // pred_region
    _
  $region9: #{baseline_forward.1} parent=0 // pred_fallthru
    _
  // Predicated region
  $region10: #{baseline_forward.1} parent=0 // pred_check
    _
  $region11: #{baseline_forward.1} parent=0 // pred_check_branch
    %14 = sbr.rel (0) target = $region13
  $region12: #{baseline_forward.1} parent=0 // pred_region
    _
  $region13: #{baseline_forward.1} parent=0 // pred_fallthru
    _
  %v15 = vld [vmem:[%s1] sm:$0x3]
  %v16 = vld [vmem:[%s0] sm:$0xff]
  %v17 = vld [vmem:[%s0 + $0x8] sm:$0xff]
  %v18 = vld [vmem:[%s0 + $0x10] sm:$0xff]
  %v19 = vld [vmem:[%s0 + $0x18] sm:$0xff]
  %v20 = vld [vmem:[%s0 + $0x20] sm:$0xff]
  %v21 = vld [vmem:[%s0 + $0x28] sm:$0xff]
  %v22 = vld [vmem:[%s0 + $0x30] sm:$0xff]
  %v23 = vld [vmem:[%s0 + $0x38] sm:$0xff]
  %v24 = vld [vmem:[%s0 + $0x40] sm:$0xff]
  %v25 = vld [vmem:[%s0 + $0x48] sm:$0xff]
  %v26 = vld [vmem:[%s0 + $0x50] sm:$0xff]
  %v27 = vld [vmem:[%s0 + $0x58] sm:$0xff]
  %v28 = vld [vmem:[%s0 + $0x60] sm:$0xff]
  %v29 = vld [vmem:[%s0 + $0x68] sm:$0xff]
  %v30 = vld [vmem:[%s0 + $0x70] sm:$0xff]
  %v31 = vld [vmem:[%s0 + $0x78] sm:$0xff]
  %v32 = vld [vmem:[%s0 + $0x80] sm:$0xff]
  %v33 = vld [vmem:[%s0 + $0x88] sm:$0xff]
  %v34 = vld [vmem:[%s0 + $0x90] sm:$0xff]
  %v35 = vld [vmem:[%s0 + $0x98] sm:$0xff]
  %v36 = vld [vmem:[%s0 + $0xa0] sm:$0xff]
  %v37 = vld [vmem:[%s0 + $0xa8] sm:$0xff]
  %v38 = vld [vmem:[%s0 + $0xb0] sm:$0xff]
  %v39 = vld [vmem:[%s0 + $0xb8] sm:$0xff]
  %v40 = vld [vmem:[%s0 + $0xc0] sm:$0xff]
  %v41 = vld [vmem:[%s0 + $0xc8] sm:$0xff]
  %v42 = vld [vmem:[%s0 + $0xd0] sm:$0xff]
  %v43 = vld [vmem:[%s0 + $0xd8] sm:$0xff]
  %v44 = vld [vmem:[%s0 + $0xe0] sm:$0xff]
  %v45 = vld [vmem:[%s0 + $0xe8] sm:$0xff]
  %v46 = vld [vmem:[%s0 + $0xf0] sm:$0xff]
  %v47 = vld [vmem:[%s0 + $0xf8] sm:$0xff]
  %s48 = sld [smem:[#allocation2]]
  %v49 = vstv %s48
  %v51 = vlaneseq
  %v52 = vshrl.u32 %v51, 7
  %v53 = vsub.s32 0, %v52
  %v54 = vrot.slane %v15, %v53
  %v55 = vlaneseq
  %v56 = vshrl.u32 %v55, 7
  %v57 = vsub.s32 1, %v56
  %v58 = vrot.slane %v15, %v57
  %61 = vmatprep.subr.mxu0 0.0
  %62 = vmatpush1.msra.mxu0 %v31
  %63 = vmatprep.subr.mxu0 0.0
  %64 = vmatpush1.msra.mxu0 %v30
  %65 = vmatprep.subr.mxu0 0.0
  %66 = vmatpush1.msra.mxu0 %v29
  %67 = vmatprep.subr.mxu0 0.0
  %68 = vmatpush1.msra.mxu0 %v28
  %69 = vmatprep.subr.mxu0 0.0
  %70 = vmatpush1.msra.mxu0 %v27
  %71 = vmatprep.subr.mxu0 0.0
  %72 = vmatpush1.msra.mxu0 %v26
  %73 = vmatprep.subr.mxu0 0.0
  %74 = vmatpush1.msra.mxu0 %v25
  %75 = vmatprep.subr.mxu0 0.0
  %76 = vmatpush1.msra.mxu0 %v24
  %77 = vmatprep.subr.mxu0 0.0
  %78 = vmatpush1.msra.mxu0 %v23
  %79 = vmatprep.subr.mxu0 0.0
  %80 = vmatpush1.msra.mxu0 %v22
  %81 = vmatprep.subr.mxu0 0.0
  %82 = vmatpush1.msra.mxu0 %v21
  %83 = vmatprep.subr.mxu0 0.0
  %84 = vmatpush1.msra.mxu0 %v20
  %85 = vmatprep.subr.mxu0 0.0
  %86 = vmatpush1.msra.mxu0 %v19
  %87 = vmatprep.subr.mxu0 0.0
  %88 = vmatpush1.msra.mxu0 %v18
  %89 = vmatprep.subr.mxu0 0.0
  %90 = vmatpush1.msra.mxu0 %v17
  %91 = vmatprep.subr.mxu0 0.0
  %92 = vmatpush1.msra.mxu0 %v16
  %93 = vmatprep.subr.mxu0 0.0
  %94 = vmatpush2.msra.mxu0 %v47
  %95 = vmatprep.subr.mxu0 0.0
  %96 = vmatpush2.msra.mxu0 %v46
  %97 = vmatprep.subr.mxu0 0.0
  %98 = vmatpush2.msra.mxu0 %v45
  %99 = vmatprep.subr.mxu0 0.0
  %100 = vmatpush2.msra.mxu0 %v44
  %101 = vmatprep.subr.mxu0 0.0
  %102 = vmatpush2.msra.mxu0 %v43
  %103 = vmatprep.subr.mxu0 0.0
  %104 = vmatpush2.msra.mxu0 %v42
  %105 = vmatprep.subr.mxu0 0.0
  %106 = vmatpush2.msra.mxu0 %v41
  %107 = vmatprep.subr.mxu0 0.0
  %108 = vmatpush2.msra.mxu0 %v40
  %109 = vmatprep.subr.mxu0 0.0
  %110 = vmatpush2.msra.mxu0 %v39
  %111 = vmatprep.subr.mxu0 0.0
  %112 = vmatpush2.msra.mxu0 %v38
  %113 = vmatprep.subr.mxu0 0.0
  %114 = vmatpush2.msra.mxu0 %v37
  %115 = vmatprep.subr.mxu0 0.0
  %116 = vmatpush2.msra.mxu0 %v36
  %117 = vmatprep.subr.mxu0 0.0
  %118 = vmatpush2.msra.mxu0 %v35
  %119 = vmatprep.subr.mxu0 0.0
  %120 = vmatpush2.msra.mxu0 %v34
  %121 = vmatprep.subr.mxu0 0.0
  %122 = vmatpush2.msra.mxu0 %v33
  %123 = vmatprep.subr.mxu0 0.0
  %124 = vmatpush2.msra.mxu0 %v32
  %125 = vmatprep.mubr.f32.mxu0 %v58
  %126 = vmatmul.mubr.f32.gmra.mxu0 %v54
  %v127 = vpop.f32.mrf.mxu0
  %v128 = vadd.f32 %v49, %v127
  %v129 = vpop.f32.mrf.mxu0
  %130 = vdwg.mxu0
  %v131 = vxor.u32 %v128, 2147483648
  %v132 = vmul.f32 %v131, 1.442695
  %v133 = vpow.pop %v132
  %v134 = vadd.f32 %v133, 1.0
  %v135 = vrcp.pop %v134
  %v136 = vmul.f32 1.0, %v135
  %137 = vst [vmem:[%s3] sm:$0x1] %v136
  // Predicated region
  $region14: #{baseline_forward.1} parent=0 // pred_check
    _
  $region15: #{baseline_forward.1} parent=0 // pred_check_branch
    %139 = sbr.rel (0) target = $region17
  $region16: #{baseline_forward.1} parent=0 // pred_region
    _
  $region17: #{baseline_forward.1} parent=0 // pred_fallthru
    _
  // Predicated region
  $region18: #{baseline_forward.1} parent=0 // pred_check
    _
  $region19: #{baseline_forward.1} parent=0 // pred_check_branch
    %141 = sbr.rel (0) target = $region21
  $region20: #{baseline_forward.1} parent=0 // pred_region
    _
  $region21: #{baseline_forward.1} parent=0 // pred_fallthru
    _

</llo_original>
